<compile_context>
chip_gen: v7x
topology: tpu7x:2x2x1
jax: 0.10.0
libtpu: 0.0.40
codegen_flags: <defaults>
</compile_context>

<pallas_src>
import functools

import jax
import jax.numpy as jnp
from jax.experimental import pallas as pl
from jax.experimental.pallas import tpu as pltpu

HIDDEN = 10          # fc1 output / LayerNorm normalized dim
LN_EPS = 1e-5        # nn.LayerNorm default eps
INV_HIDDEN = 1.0 / HIDDEN
LANE = 128
SUBLANE = 8


def _round_up(x: int, m: int) -> int:
    return ((x + m - 1) // m) * m


def _round_down(x: int, m: int) -> int:
    return (x // m) * m


def _vmem_capacity_bytes() -> int:
    """Physical VMEM per core (v5e/v6e: 128 MiB, v7x: 64 MiB). Conservative fallback."""
    try:
        cap = getattr(pltpu.get_tpu_info(), "vmem_capacity_bytes", None)
        if cap:
            return int(cap)
    except Exception:
        pass
    return 64 << 20  # v7x-safe default


def toy_model_kernel(x_ref, w1t_ref, w2eff_ref, bias_ref, o_ref):
    # fc1 (no bias): (TB, in) @ (in, 10) on the MXU, f32 accumulation (inputs may be bf16).
    h = jnp.dot(x_ref[...], w1t_ref[...], preferred_element_type=jnp.float32)

    # ReLU
    h = jnp.maximum(h, 0.0)

    # LayerNorm statistics, centered form (robust to cancellation; VPU has slack here).
    mean = jnp.sum(h, axis=-1, keepdims=True) * INV_HIDDEN
    d = h - mean
    var = jnp.sum(d * d, axis=-1, keepdims=True) * INV_HIDDEN
    hn = d * jax.lax.rsqrt(var + LN_EPS)                        # gamma/beta folded into fc2

    # fc2 with folded LN affine: (TB, 10) @ (10, out) + beta @ w2.T   (all f32)
    out = jnp.dot(hn, w2eff_ref[...], preferred_element_type=jnp.float32) + bias_ref[...]
    o_ref[...] = out.astype(o_ref.dtype)


@functools.partial(jax.jit, static_argnames=("block_batch", "stream_bf16"))
def toy_model_forward(x, w1, ln_gamma, ln_beta, w2, *, block_batch: int = 32768,
                      stream_bf16: bool = True):
    """x: (B, in_features); w1: (10, in_features); ln_*: (10,); w2: (out_features, 10)."""
    batch, in_features = x.shape
    out_features = w2.shape[0]
    out_dtype = x.dtype

    # ---- wrapper-side weight prep (tiny, runs once per compile) ----
    gamma = jnp.asarray(ln_gamma, jnp.float32)
    beta = jnp.asarray(ln_beta, jnp.float32)
    w2_t = jnp.asarray(w2, jnp.float32).T                       # (10, out_features)
    w2_eff = gamma[:, None] * w2_t                              # LN affine folded into fc2 (exact)
    bias = (beta @ w2_t).reshape(1, out_features)               # (1, out_features)

    # bf16 streaming of x / w1 halves the dominant HBM read bytes; dots keep f32 accumulation.
    stream_dtype = jnp.bfloat16 if stream_bf16 else x.dtype
    x_stream = x.astype(stream_dtype)
    w1_t = jnp.asarray(w1).astype(stream_dtype).T               # (in_features, 10)
    x_bytes = jnp.dtype(stream_dtype).itemsize
    o_bytes = jnp.dtype(out_dtype).itemsize

    # ---- batch tiling (kernel is HBM-bandwidth bound: biggest tile VMEM allows) ----
    if batch < SUBLANE:                                         # tiny pad only (few rows)
        x_stream = jnp.pad(x_stream, ((0, SUBLANE - batch), (0, 0)))
        work_batch = SUBLANE
    else:
        work_batch = batch

    vmem_cap = _vmem_capacity_bytes()
    # Lane-padded, double-buffered streamed bytes per batch row (x tile + out tile).
    per_row = (2 * _round_up(in_features, LANE) * x_bytes
               + 2 * _round_up(out_features, LANE) * o_bytes)
    budget = (vmem_cap * 45) // 100                             # ~29 MiB v7x, ~58 MiB v5e/v6e
    max_tb = max(SUBLANE, _round_down(budget // per_row, SUBLANE))

    align = 16 if x_bytes == 2 else SUBLANE                     # bf16 packs 16 rows/sublane-pair
    single_tile_cap = min(block_batch, max_tb)
    if work_batch <= single_tile_cap and work_batch < 2 * 8192:
        tb = work_batch                                         # full-extent block: grid=(1,)
    else:
        tb = min(block_batch, max_tb, work_batch)
        if pl.cdiv(work_batch, tb) < 2 and work_batch >= 2 * 8192:
            # v7x megacore: guarantee >=2 grid steps so both TensorCores get work.
            tb = _round_up(pl.cdiv(work_batch, 2), align)
        else:
            tb = max(align, _round_down(tb, align))
        if tb >= work_batch:
            tb = work_batch                                     # full-extent block is always legal
    grid = (pl.cdiv(work_batch, tb),)                           # ragged tail masked by Pallas

    # Explicit, lane-padding-aware VMEM budget with headroom, capped below physical VMEM.
    weight_bytes = 2 * (_round_up(in_features, 16) * LANE * x_bytes
                        + _round_up(HIDDEN, SUBLANE) * _round_up(out_features, LANE) * 4
                        + SUBLANE * _round_up(out_features, LANE) * 4)
    vmem_limit = tb * per_row + weight_bytes + (4 << 20)
    vmem_limit = int(max(16 << 20, min(vmem_limit, (vmem_cap * 85) // 100)))

    out = pl.pallas_call(
        toy_model_kernel,
        out_shape=jax.ShapeDtypeStruct((work_batch, out_features), out_dtype),
        grid=grid,
        in_specs=[
            pl.BlockSpec((tb, in_features), lambda i: (i, 0)),          # streamed x tile
            pl.BlockSpec((in_features, HIDDEN), lambda i: (0, 0)),      # resident fc1 weight
            pl.BlockSpec((HIDDEN, out_features), lambda i: (0, 0)),     # resident folded fc2
            pl.BlockSpec((1, out_features), lambda i: (0, 0)),          # resident folded bias
        ],
        out_specs=pl.BlockSpec((tb, out_features), lambda i: (i, 0)),
        compiler_params=pltpu.CompilerParams(
            dimension_semantics=("parallel",),
            vmem_limit_bytes=vmem_limit,
        ),
    )(x_stream, w1_t, w2_eff, bias)

    if work_batch != batch:
        out = out[:batch]
    return out


def toy_model_reference(x, w1, ln_gamma, ln_beta, w2):
    hp = jax.lax.Precision.HIGHEST
    h = jnp.dot(x, w1.T, precision=hp)
    h = jnp.maximum(h, 0.0)
    mean = jnp.mean(h, axis=-1, keepdims=True)
    var = jnp.mean((h - mean) ** 2, axis=-1, keepdims=True)
    hn = (h - mean) / jnp.sqrt(var + LN_EPS)
    hn = hn * ln_gamma + ln_beta
    return jnp.dot(hn, w2.T, precision=hp)


if __name__ == "__main__":
    in_features = 32
    out_features = 16

    key = jax.random.PRNGKey(0)
    k_x, k_w1, k_w2, k_g, k_b = jax.random.split(key, 5)

    # Deterministic synthetic parameters (shapes from ToyModel.__init__).
    w1 = jax.random.normal(k_w1, (HIDDEN, in_features), dtype=jnp.float32) * 0.1   # fc1.weight
    w2 = jax.random.normal(k_w2, (out_features, HIDDEN), dtype=jnp.float32) * 0.1  # fc2.weight
    # Non-trivial LN affine so the gamma/beta folding is actually exercised.
    ln_gamma = 1.0 + 0.1 * jax.random.normal(k_g, (HIDDEN,), dtype=jnp.float32)
    ln_beta = 0.1 * jax.random.normal(k_b, (HIDDEN,), dtype=jnp.float32)

    # bf16-rounded inputs for a tight numerical check of the kernel path.
    w1_r = w1.astype(jnp.bfloat16).astype(jnp.float32)

    ok = True
    # (batch, block_batch): covers tiny-pad path (4), exact tile (8), full-extent
    # single tile (20), and the multi-tile + ragged-tail streaming path (52 @ tb=16).
    for batch, bb in ((4, 32768), (8, 32768), (20, 32768), (52, 16)):
        x = jax.random.normal(k_x, (batch, in_features), dtype=jnp.float32)
        out = toy_model_forward(x, w1, ln_gamma, ln_beta, w2, block_batch=bb)
        out = jax.block_until_ready(out)

        ref_f32 = toy_model_reference(x, w1, ln_gamma, ln_beta, w2)
        x_r = x.astype(jnp.bfloat16).astype(jnp.float32)
        ref_bf16in = toy_model_reference(x_r, w1_r, ln_gamma, ln_beta, w2)

        ok &= out.shape == (batch, out_features)
        ok &= out.dtype == jnp.float32
        # Loose check vs pure-f32 reference (bf16 input rounding only).
        ok &= bool(jnp.allclose(out, ref_f32, atol=2e-2, rtol=2e-2))
        # Tight check vs reference fed the same bf16-rounded x / w1.
        ok &= bool(jnp.allclose(out, ref_bf16in, atol=1e-4, rtol=1e-4))

    assert ok
    print("KERNEL_OK")
</pallas_src>

<mosaic_0001>
module attributes {stable_mosaic.version = 11 : i64} {
  func.func @toy_model_kernel(%arg0: i32, %arg1: memref<8x32xbf16, #tpu.memory_space<vmem>>, %arg2: memref<32x10xbf16, #tpu.memory_space<vmem>>, %arg3: memref<10x16xf32, #tpu.memory_space<vmem>>, %arg4: memref<1x16xf32, #tpu.memory_space<vmem>>, %arg5: memref<8x16xf32, #tpu.memory_space<vmem>>) attributes {dimension_semantics = [#tpu.dimension_semantics<parallel>], iteration_bounds = array<i64: 1>, scalar_prefetch = 0 : i64, scratch_operands = 0 : i64, tpu.core_type = #tpu.core_type<tc>, window_params = [{transform_indices = @transform_0, window_bounds = array<i64: 8, 32>}, {pipeline_mode = #tpu.pipeline_mode<synchronous>, transform_indices = @transform_1, window_bounds = array<i64: 32, 10>}, {pipeline_mode = #tpu.pipeline_mode<synchronous>, transform_indices = @transform_2, window_bounds = array<i64: 10, 16>}, {pipeline_mode = #tpu.pipeline_mode<synchronous>, transform_indices = @transform_3, window_bounds = array<i64: 1, 16>}, {transform_indices = @transform_4, window_bounds = array<i64: 8, 16>}]} {
    %c0 = arith.constant 0 : index
    %c0_0 = arith.constant 0 : index
    %0 = vector.load %arg1[%c0, %c0_0] : memref<8x32xbf16, #tpu.memory_space<vmem>>, vector<8x32xbf16>
    %c0_1 = arith.constant 0 : index
    %c0_2 = arith.constant 0 : index
    %1 = vector.load %arg2[%c0_1, %c0_2] : memref<32x10xbf16, #tpu.memory_space<vmem>>, vector<32x10xbf16>
    %cst = arith.constant dense<0.000000e+00> : vector<8x10xf32>
    %2 = tpu.matmul %0, %1, %cst {dimension_numbers = #tpu.dot_dimension_numbers<[1], [0], [0], [1], [0, 0, 1, 1], [], []>} : vector<8x32xbf16>, vector<32x10xbf16>, vector<8x10xf32> -> vector<8x10xf32>
    %cst_3 = arith.constant 0.000000e+00 : f32
    %3 = vector.broadcast %cst_3 : f32 to vector<8x10xf32>
    %4 = arith.maximumf %2, %3 : vector<8x10xf32>
    %cst_4 = arith.constant dense<0.000000e+00> : vector<8xf32>
    %5 = vector.multi_reduction <add>, %4, %cst_4 [1] : vector<8x10xf32> to vector<8xf32>
    %6 = vector.shape_cast %5 : vector<8xf32> to vector<8x1xf32>
    %cst_5 = arith.constant 1.000000e-01 : f32
    %7 = vector.broadcast %cst_5 : f32 to vector<8x1xf32>
    %8 = arith.mulf %6, %7 : vector<8x1xf32>
    %9 = vector.broadcast %8 : vector<8x1xf32> to vector<8x10xf32>
    %10 = arith.subf %4, %9 : vector<8x10xf32>
    %11 = arith.mulf %10, %10 : vector<8x10xf32>
    %cst_6 = arith.constant dense<0.000000e+00> : vector<8xf32>
    %12 = vector.multi_reduction <add>, %11, %cst_6 [1] : vector<8x10xf32> to vector<8xf32>
    %13 = vector.shape_cast %12 : vector<8xf32> to vector<8x1xf32>
    %cst_7 = arith.constant 1.000000e-01 : f32
    %14 = vector.broadcast %cst_7 : f32 to vector<8x1xf32>
    %15 = arith.mulf %13, %14 : vector<8x1xf32>
    %cst_8 = arith.constant 9.99999974E-6 : f32
    %16 = vector.broadcast %cst_8 : f32 to vector<8x1xf32>
    %17 = arith.addf %15, %16 : vector<8x1xf32>
    %18 = math.rsqrt %17 : vector<8x1xf32>
    %19 = vector.broadcast %18 : vector<8x1xf32> to vector<8x10xf32>
    %20 = arith.mulf %10, %19 : vector<8x10xf32>
    %c0_9 = arith.constant 0 : index
    %c0_10 = arith.constant 0 : index
    %21 = vector.load %arg3[%c0_9, %c0_10] : memref<10x16xf32, #tpu.memory_space<vmem>>, vector<10x16xf32>
    %cst_11 = arith.constant dense<0.000000e+00> : vector<8x16xf32>
    %22 = tpu.matmul %20, %21, %cst_11 {dimension_numbers = #tpu.dot_dimension_numbers<[1], [0], [0], [1], [0, 0, 1, 1], [], []>} : vector<8x10xf32>, vector<10x16xf32>, vector<8x16xf32> -> vector<8x16xf32>
    %c0_12 = arith.constant 0 : index
    %c0_13 = arith.constant 0 : index
    %23 = vector.load %arg4[%c0_12, %c0_13] : memref<1x16xf32, #tpu.memory_space<vmem>>, vector<1x16xf32>
    %24 = vector.broadcast %23 : vector<1x16xf32> to vector<8x16xf32>
    %25 = arith.addf %22, %24 : vector<8x16xf32>
    %c0_14 = arith.constant 0 : index
    %c0_15 = arith.constant 0 : index
    %26 = vector.load %arg5[%c0_14, %c0_15] : memref<8x16xf32, #tpu.memory_space<vmem>>, vector<8x16xf32>
    tpu.vector_store %arg5[%c0_14, %c0_15], %25 {strides = array<i32>} : memref<8x16xf32, #tpu.memory_space<vmem>>, vector<8x16xf32>,
    return
  }
  func.func @transform_0(%arg0: i32) -> (i32, i32) {
    %c0_i32 = arith.constant 0 : i32
    %c0_i32_0 = arith.constant 0 : i32
    return %arg0, %c0_i32 : i32, i32
  }
  func.func @transform_1(%arg0: i32) -> (i32, i32) {
    %c0_i32 = arith.constant 0 : i32
    %c0_i32_0 = arith.constant 0 : i32
    %c0_i32_1 = arith.constant 0 : i32
    return %c0_i32, %c0_i32_0 : i32, i32
  }
  func.func @transform_2(%arg0: i32) -> (i32, i32) {
    %c0_i32 = arith.constant 0 : i32
    %c0_i32_0 = arith.constant 0 : i32
    %c0_i32_1 = arith.constant 0 : i32
    return %c0_i32, %c0_i32_0 : i32, i32
  }
  func.func @transform_3(%arg0: i32) -> (i32, i32) {
    %c0_i32 = arith.constant 0 : i32
    %c0_i32_0 = arith.constant 0 : i32
    %c0_i32_1 = arith.constant 0 : i32
    return %c0_i32, %c0_i32_0 : i32, i32
  }
  func.func @transform_4(%arg0: i32) -> (i32, i32) {
    %c0_i32 = arith.constant 0 : i32
    %c0_i32_0 = arith.constant 0 : i32
    return %arg0, %c0_i32 : i32, i32
  }
}

</mosaic_0001>

<llo_original>
// kernel: toy_model_forward.1
$region0: #{toy_model_forward.1}
  #allocation0 [shape = 'u32[]', space=smem, size = 0x4, offset = 0x4, fixed_abs, tag = 'smem constant byte address 0x4 - core index']
  #allocation1 [shape = 'u32[144,128]{1,0:T(1,128)}', space=vmem, size = 0x12000, scoped, tag = 'internal scratch']
  %s0 = inlined_call_operand.vmem [shape: bf16[8,32], index: 0, kind: input, shape index: {}]
  %s1 = inlined_call_operand.vmem [shape: bf16[32,10], index: 1, kind: input, shape index: {}]
  %s2 = inlined_call_operand.vmem [shape: f32[10,16], index: 2, kind: input, shape index: {}]
  %s3 = inlined_call_operand.vmem [shape: f32[1,16], index: 3, kind: input, shape index: {}]
  %s4 = inlined_call_operand.vmem [shape: f32[8,16], index: 4, kind: output, shape index: {}]
  %s5 = sld [smem:[#allocation0]]
  $region26: #{toy_model_forward.1} parent=0
    _
  %s7 = ssub.s32 1, %s5
  %s8 = scalar_select 0, %s7, %s5
  // Predicated region
  $region2: #{toy_model_forward.1} parent=0 // pred_check
    _
  $region3: #{toy_model_forward.1} parent=0 // pred_check_branch
    %10 = sbr.rel (0) target = $region5
  $region4: #{toy_model_forward.1} parent=0 // pred_region
    _
  $region5: #{toy_model_forward.1} parent=0 // pred_fallthru
    _
  // Predicated region
  $region6: #{toy_model_forward.1} parent=0 // pred_check
    _
  $region7: #{toy_model_forward.1} parent=0 // pred_check_branch
    %12 = sbr.rel (0) target = $region9
  $region8: #{toy_model_forward.1} parent=0 // pred_region
    _
  $region9: #{toy_model_forward.1} parent=0 // pred_fallthru
    _
  // Predicated region
  $region10: #{toy_model_forward.1} parent=0 // pred_check
    _
  $region11: #{toy_model_forward.1} parent=0 // pred_check_branch
    %14 = sbr.rel (0) target = $region13
  $region12: #{toy_model_forward.1} parent=0 // pred_region
    _
  $region13: #{toy_model_forward.1} parent=0 // pred_fallthru
    _
  // Predicated region
  $region14: #{toy_model_forward.1} parent=0 // pred_check
    _
  $region15: #{toy_model_forward.1} parent=0 // pred_check_branch
    %16 = sbr.rel (0) target = $region17
  $region16: #{toy_model_forward.1} parent=0 // pred_region
    _
  $region17: #{toy_model_forward.1} parent=0 // pred_fallthru
    _
  %v18 = vld [vmem:[%s0] sm:$0xf]
  %v19 = vld [vmem:[%s1] sm:$0xf]
  %v20 = vld [vmem:[%s1 + $0x4] sm:$0xf]
  %v21 = vld [vmem:[%s1 + $0x8] sm:$0xf]
  %v22 = vld [vmem:[%s1 + $0xc] sm:$0xf]
  %v27 = vunpack.c.l.b16 %v19
  %v28 = vunpack.c.l.b16 %v20
  %v29 = vunpack.c.l.b16 %v21
  %v30 = vunpack.c.l.b16 %v22
  %v31 = vpack.c.b16 %v28, %v27
  %v32 = vpack.c.b16 %v30, %v29
  %vm35 = vcmask 261120
  %v37 = vsel %vm35, %v18, 0
  %39 = vmatprep.subr.bf16.mxu0 0
  %40 = vmatpush1.bf16.msra.mxu0 %v31
  %41 = vmatprep.subr.bf16.mxu0 0
  %42 = vmatpush1.bf16.msra.mxu0 %v32
  %43 = vmatprep.subr.bf16.mxu0 0
  %44 = vmatpush1.bf16.msra.mxu0 0
  %45 = vmatprep.subr.bf16.mxu0 0
  %46 = vmatpush1.bf16.msra.mxu0 0
  %47 = vmatprep.subr.bf16.mxu0 0
  %48 = vmatpush1.bf16.msra.mxu0 0
  %49 = vmatprep.subr.bf16.mxu0 0
  %50 = vmatpush1.bf16.msra.mxu0 0
  %51 = vmatprep.subr.bf16.mxu0 0
  %52 = vmatpush1.bf16.msra.mxu0 0
  %53 = vmatprep.subr.bf16.mxu0 0
  %54 = vmatpush1.bf16.msra.mxu0 0
  %55 = vmatprep.subr.bf16.mxu0 0
  %56 = vmatpush1.bf16.msra.mxu0 0
  %57 = vmatprep.subr.bf16.mxu0 0
  %58 = vmatpush1.bf16.msra.mxu0 0
  %59 = vmatprep.subr.bf16.mxu0 0
  %60 = vmatpush1.bf16.msra.mxu0 0
  %61 = vmatprep.subr.bf16.mxu0 0
  %62 = vmatpush1.bf16.msra.mxu0 0
  %63 = vmatprep.subr.bf16.mxu0 0
  %64 = vmatpush1.bf16.msra.mxu0 0
  %65 = vmatprep.subr.bf16.mxu0 0
  %66 = vmatpush1.bf16.msra.mxu0 0
  %67 = vmatprep.subr.bf16.mxu0 0
  %68 = vmatpush1.bf16.msra.mxu0 0
  %69 = vmatprep.subr.bf16.mxu0 0
  %70 = vmatpush1.bf16.msra.mxu0 0
  %71 = vmatprep.mubr.bf16.mxu0 0
  %72 = vmatmul.mubr.bf16.gmra.mrb[0].mxu0 %v37
  %v73 = vpop.f32.mrb[0].mxu0
  %v74 = vadd.f32 0.0, %v73
  %v75 = vpop.f32.mrb[0].mxu0
  %v76 = vpop.f32.mrb[0].mxu0
  %v77 = vpop.f32.mrb[0].mxu0
  %78 = vdwg.mxu0
  %v79 = vmax.f32 %v74, 0.0
  %vm80 = vcmask 80896
  %v81 = vsel %vm80, %v79, 0.0
  %82 = vadd.xlane.f32.xlu0 %v81
  %v83 = vpop.xlane.xlu0 %82
  %v84 = vmul.f32 %v83, 0.1
  %v85 = vsub.f32 %v79, %v84
  %v86 = vmul.f32 %v85, %v85
  %v87 = vsel %vm80, %v86, 0.0
  %88 = vadd.xlane.f32.xlu0 %v87
  %v89 = vpop.xlane.xlu0 %88
  %v90 = vmul.f32 %v89, 0.1
  %v91 = vadd.f32 %v90, 1e-05
  %v92 = vrsqrt.pop %v91
  %v93 = vmul.f32 %v85, %v92
  %v94 = vld [vmem:[%s2] sm:$0xff]
  %v95 = vld [vmem:[%s2 + $0x8] sm:$0x3]
  %v96 = vld [vmem:[%s3] sm:$0x1]
  %v98 = vlaneseq
  %v99 = vshrl.u32 %v98, 7
  %v100 = vsub.s32 0, %v99
  %v101 = vrot.slane %v96, %v100
  %v104 = vsel %vm80, %v93, 0
  %vm106 = vcmask 1041408
  %v108 = vsel %vm106, %v95, 0
  %110 = vmatprep.subr.mxu0 0.0
  %111 = vmatpush1.msra.mxu0 %v94
  %112 = vmatprep.subr.mxu0 0.0
  %113 = vmatpush1.msra.mxu0 %v108
  %114 = vmatprep.subr.mxu0 0.0
  %115 = vmatpush1.msra.mxu0 0.0
  %116 = vmatprep.subr.mxu0 0.0
  %117 = vmatpush1.msra.mxu0 0.0
  %118 = vmatprep.subr.mxu0 0.0
  %119 = vmatpush1.msra.mxu0 0.0
  %120 = vmatprep.subr.mxu0 0.0
  %121 = vmatpush1.msra.mxu0 0.0
  %122 = vmatprep.subr.mxu0 0.0
  %123 = vmatpush1.msra.mxu0 0.0
  %124 = vmatprep.subr.mxu0 0.0
  %125 = vmatpush1.msra.mxu0 0.0
  %126 = vmatprep.subr.mxu0 0.0
  %127 = vmatpush1.msra.mxu0 0.0
  %128 = vmatprep.subr.mxu0 0.0
  %129 = vmatpush1.msra.mxu0 0.0
  %130 = vmatprep.subr.mxu0 0.0
  %131 = vmatpush1.msra.mxu0 0.0
  %132 = vmatprep.subr.mxu0 0.0
  %133 = vmatpush1.msra.mxu0 0.0
  %134 = vmatprep.subr.mxu0 0.0
  %135 = vmatpush1.msra.mxu0 0.0
  %136 = vmatprep.subr.mxu0 0.0
  %137 = vmatpush1.msra.mxu0 0.0
  %138 = vmatprep.subr.mxu0 0.0
  %139 = vmatpush1.msra.mxu0 0.0
  %140 = vmatprep.subr.mxu0 0.0
  %141 = vmatpush1.msra.mxu0 0.0
  %142 = vmatprep.subr.mxu0 0.0
  %143 = vmatpush1.msra.mxu0 0.0
  %144 = vmatprep.subr.mxu0 0.0
  %145 = vmatpush1.msra.mxu0 0.0
  %146 = vmatprep.subr.mxu0 0.0
  %147 = vmatpush1.msra.mxu0 0.0
  %148 = vmatprep.subr.mxu0 0.0
  %149 = vmatpush1.msra.mxu0 0.0
  %150 = vmatprep.subr.mxu0 0.0
  %151 = vmatpush1.msra.mxu0 0.0
  %152 = vmatprep.subr.mxu0 0.0
  %153 = vmatpush1.msra.mxu0 0.0
  %154 = vmatprep.subr.mxu0 0.0
  %155 = vmatpush1.msra.mxu0 0.0
  %156 = vmatprep.subr.mxu0 0.0
  %157 = vmatpush1.msra.mxu0 0.0
  %158 = vmatprep.subr.mxu0 0.0
  %159 = vmatpush1.msra.mxu0 0.0
  %160 = vmatprep.subr.mxu0 0.0
  %161 = vmatpush1.msra.mxu0 0.0
  %162 = vmatprep.subr.mxu0 0.0
  %163 = vmatpush1.msra.mxu0 0.0
  %164 = vmatprep.subr.mxu0 0.0
  %165 = vmatpush1.msra.mxu0 0.0
  %166 = vmatprep.subr.mxu0 0.0
  %167 = vmatpush1.msra.mxu0 0.0
  %168 = vmatprep.subr.mxu0 0.0
  %169 = vmatpush1.msra.mxu0 0.0
  %170 = vmatprep.subr.mxu0 0.0
  %171 = vmatpush1.msra.mxu0 0.0
  %172 = vmatprep.subr.mxu0 0.0
  %173 = vmatpush1.msra.mxu0 0.0
  %174 = vmatprep.mubr.f32.mxu0 0.0
  %175 = vmatmul.mubr.f32.gmra.mrb[0].mxu0 %v104
  %v176 = vpop.f32.mrb[0].mxu0
  %v177 = vadd.f32 %v101, %v176
  %v178 = vpop.f32.mrb[0].mxu0
  %179 = vdwg.mxu0
  %vm180 = vcmask 130048
  %181 = vst.msk [vmem:[%s4] sm:$0xff] %vm180, %v177
  // Predicated region
  $region18: #{toy_model_forward.1} parent=0 // pred_check
    _
  $region19: #{toy_model_forward.1} parent=0 // pred_check_branch
    %183 = sbr.rel (0) target = $region21
  $region20: #{toy_model_forward.1} parent=0 // pred_region
    _
  $region21: #{toy_model_forward.1} parent=0 // pred_fallthru
    _
  // Predicated region
  $region22: #{toy_model_forward.1} parent=0 // pred_check
    _
  $region23: #{toy_model_forward.1} parent=0 // pred_check_branch
    %185 = sbr.rel (0) target = $region25
  $region24: #{toy_model_forward.1} parent=0 // pred_region
    _
  $region25: #{toy_model_forward.1} parent=0 // pred_fallthru
    _

</llo_original>
